<compile_context>
chip_gen: v7x
topology: tpu7x:2x2x1
jax: 0.10.0
libtpu: 0.0.40
codegen_flags: <defaults>
</compile_context>

<pallas_src>
import jax
import jax.numpy as jnp
from jax.experimental import pallas as pl
from jax.experimental.pallas import tpu as pltpu


def _round_up(x, m):
    return ((x + m - 1) // m) * m


def autodebias_dot_kernel(u_ref, v_ref, out_ref):
    """u, v: (k, TILE_B) f32 -> out: (1, TILE_B) f32 = sum(u * v, axis=0)."""
    # VPU multiply + small sublane reduction over k; lane-dense store.
    out_ref[...] = jnp.sum(u_ref[...] * v_ref[...], axis=0, keepdims=True)


def autodebias_forward(x, W_table, H_table, *, tile_b=8192):
    """Pallas-backed AutoDebias forward.

    Args:
      x:        (B, 2) int32 indices [user_idx, item_idx]
      W_table:  (num_users, k) float32 user embedding table
      H_table:  (num_items, k) float32 item embedding table
      tile_b:   batch tile size (forced to a multiple of 128 lanes)
    Returns:
      (B,) float32 — matches torch.sum(U_emb.mul(V_emb), 1).
    """
    # --- glue: embedding gathers (torch.nn.Embedding lookups), transposed so
    # batch lands on the lane axis inside the kernel ---
    u_t = W_table[x[:, 0]].T                     # (k, B)
    v_t = H_table[x[:, 1]].T                     # (k, B)
    k, B = u_t.shape

    # Lane-dense tile: multiple of 128 lanes, clamped against a conservative
    # VMEM budget (2 inputs x 2 pipeline buffers x k x 4 B) and the batch.
    vmem_budget = 8 * 1024 * 1024
    max_tile = max(128, ((vmem_budget // (16 * max(k, 1))) // 128) * 128)
    tile_b = max(128, (tile_b // 128) * 128)
    tile_b = min(tile_b, max_tile, _round_up(B, 128))

    n_blocks = pl.cdiv(B, tile_b)
    b_out = n_blocks * tile_b                    # padded output slab (alloc only)

    cost = pl.CostEstimate(
        flops=2 * B * k,                         # mul + add per element
        transcendentals=0,
        bytes_accessed=(2 * B * k + B) * 4,
    )

    out = pl.pallas_call(
        autodebias_dot_kernel,
        out_shape=jax.ShapeDtypeStruct((1, b_out), jnp.float32),
        grid=(n_blocks,),
        in_specs=[
            pl.BlockSpec((k, tile_b), lambda i: (0, i)),
            pl.BlockSpec((k, tile_b), lambda i: (0, i)),
        ],
        out_specs=pl.BlockSpec((1, tile_b), lambda i: (0, i)),
        compiler_params=pltpu.CompilerParams(
            # Batch tiles are independent: shard across both TensorCores on
            # v7x; no-op on single-TC v5e/v6e.
            dimension_semantics=("parallel",),
        ),
        cost_estimate=cost,
    )(u_t, v_t)

    # Invariant: lanes >= B of the last block are garbage (ragged tail / OOB
    # reads) and MUST be sliced off here before any downstream use.
    return out[0, :B]                            # (B,) like torch.sum(..., 1)


def autodebias_forward_ref(x, W_table, H_table):
    """Pure-JAX reference mirroring the PyTorch module exactly."""
    u_emb = W_table[x[:, 0]]
    v_emb = H_table[x[:, 1]]
    return jnp.sum(u_emb * v_emb, axis=1)


if __name__ == "__main__":
    num_users, num_items, embedding_k = 16, 24, 4

    key = jax.random.PRNGKey(0)
    k_w, k_h, k_u, k_i, k_u2, k_i2 = jax.random.split(key, 6)

    # torch.nn.Embedding default init is N(0, 1).
    W_table = jax.random.normal(k_w, (num_users, embedding_k), jnp.float32)
    H_table = jax.random.normal(k_h, (num_items, embedding_k), jnp.float32)

    # --- Test 1: tiny batch (single partial block, B < 128 lanes) ---
    batch = 8
    x = jnp.concatenate(
        [jax.random.randint(k_u, (batch, 1), 0, num_users, jnp.int32),
         jax.random.randint(k_i, (batch, 1), 0, num_items, jnp.int32)],
        axis=1)
    out = jax.block_until_ready(autodebias_forward(x, W_table, H_table))
    ref = autodebias_forward_ref(x, W_table, H_table)
    assert out.shape == (batch,)
    assert jnp.allclose(out, ref, atol=1e-5, rtol=1e-5)

    # --- Test 2: multi-block grid with a ragged (clamped) final block ---
    batch2 = 300
    x2 = jnp.concatenate(
        [jax.random.randint(k_u2, (batch2, 1), 0, num_users, jnp.int32),
         jax.random.randint(k_i2, (batch2, 1), 0, num_items, jnp.int32)],
        axis=1)
    out2 = jax.block_until_ready(
        autodebias_forward(x2, W_table, H_table, tile_b=128))
    ref2 = autodebias_forward_ref(x2, W_table, H_table)
    assert out2.shape == (batch2,)
    assert jnp.allclose(out2, ref2, atol=1e-5, rtol=1e-5)

    # --- Test 3: default (large) tile with non-multiple-of-128 batch ---
    batch3 = 1000
    x3 = jnp.concatenate(
        [jax.random.randint(k_u, (batch3, 1), 0, num_users, jnp.int32),
         jax.random.randint(k_i, (batch3, 1), 0, num_items, jnp.int32)],
        axis=1)
    out3 = jax.block_until_ready(autodebias_forward(x3, W_table, H_table))
    ref3 = autodebias_forward_ref(x3, W_table, H_table)
    assert out3.shape == (batch3,)
    assert jnp.allclose(out3, ref3, atol=1e-5, rtol=1e-5)

    print("KERNEL_OK")
</pallas_src>

<mosaic_0001>
module attributes {stable_mosaic.version = 11 : i64} {
  func.func @autodebias_dot_kernel(%arg0: i32, %arg1: memref<4x128xf32, #tpu.memory_space<vmem>>, %arg2: memref<4x128xf32, #tpu.memory_space<vmem>>, %arg3: memref<1x128xf32, #tpu.memory_space<vmem>>) attributes {dimension_semantics = [#tpu.dimension_semantics<parallel>], iteration_bounds = array<i64: 1>, scalar_prefetch = 0 : i64, scratch_operands = 0 : i64, tpu.core_type = #tpu.core_type<tc>, window_params = [{transform_indices = @transform_0, window_bounds = array<i64: 4, 128>}, {transform_indices = @transform_1, window_bounds = array<i64: 4, 128>}, {transform_indices = @transform_2, window_bounds = array<i64: 1, 128>}]} {
    %c0 = arith.constant 0 : index
    %c0_0 = arith.constant 0 : index
    %0 = vector.load %arg1[%c0, %c0_0] : memref<4x128xf32, #tpu.memory_space<vmem>>, vector<4x128xf32>
    %c0_1 = arith.constant 0 : index
    %c0_2 = arith.constant 0 : index
    %1 = vector.load %arg2[%c0_1, %c0_2] : memref<4x128xf32, #tpu.memory_space<vmem>>, vector<4x128xf32>
    %2 = arith.mulf %0, %1 : vector<4x128xf32>
    %cst = arith.constant dense<0.000000e+00> : vector<128xf32>
    %3 = vector.multi_reduction <add>, %2, %cst [0] : vector<4x128xf32> to vector<128xf32>
    %4 = vector.shape_cast %3 : vector<128xf32> to vector<1x128xf32>
    %c0_3 = arith.constant 0 : index
    %c0_4 = arith.constant 0 : index
    %5 = vector.load %arg3[%c0_3, %c0_4] : memref<1x128xf32, #tpu.memory_space<vmem>>, vector<1x128xf32>
    tpu.vector_store %arg3[%c0_3, %c0_4], %4 {strides = array<i32>} : memref<1x128xf32, #tpu.memory_space<vmem>>, vector<1x128xf32>,
    return
  }
  func.func @transform_0(%arg0: i32) -> (i32, i32) {
    %c0_i32 = arith.constant 0 : i32
    %c0_i32_0 = arith.constant 0 : i32
    return %c0_i32, %arg0 : i32, i32
  }
  func.func @transform_1(%arg0: i32) -> (i32, i32) {
    %c0_i32 = arith.constant 0 : i32
    %c0_i32_0 = arith.constant 0 : i32
    return %c0_i32, %arg0 : i32, i32
  }
  func.func @transform_2(%arg0: i32) -> (i32, i32) {
    %c0_i32 = arith.constant 0 : i32
    %c0_i32_0 = arith.constant 0 : i32
    return %c0_i32, %arg0 : i32, i32
  }
}

</mosaic_0001>

<llo_original>
// kernel: tpu_custom_call.1
$region0: #{tpu_custom_call.1}
  #allocation0 [shape = 'u32[]', space=smem, size = 0x4, offset = 0x4, fixed_abs, tag = 'smem constant byte address 0x4 - core index']
  #allocation1 [shape = 'u32[144,128]{1,0:T(1,128)}', space=vmem, size = 0x12000, scoped, tag = 'internal scratch']
  %s0 = inlined_call_operand.hbm [shape: f32[4,8], index: 0, kind: input, shape index: {}]
  %s1 = inlined_call_operand.hbm [shape: f32[4,8], index: 1, kind: input, shape index: {}]
  %s2 = inlined_call_operand.hbm [shape: f32[1,128], index: 2, kind: output, shape index: {}]
  %s3 = sld [smem:[#allocation0]]
  $region26: #{tpu_custom_call.1} parent=0
    _
  %s5 = ssub.s32 1, %s3
  %s6 = scalar_select 0, %s5, %s3
  $region1: #{tpu_custom_call.1} parent=0
    #allocation2 [shape = 'u8[2048]{0}', space=vmem, size = 0x800, scoped, tag = 'input window, operand 0, single buffered']
    #allocation3 [shape = 's32[1]{0}', space=sflag, size = 0x4, scoped, tag = 'scoped memory for tpu_custom_call.1']
    #allocation4 [shape = 's32[1]{0}', space=sflag, size = 0x4, scoped, tag = 'scoped memory for tpu_custom_call.1']
    #allocation5 [shape = 'u8[2048]{0}', space=vmem, size = 0x800, scoped, tag = 'input window, operand 1, single buffered']
    #allocation6 [shape = 's32[1]{0}', space=sflag, size = 0x4, scoped, tag = 'scoped memory for tpu_custom_call.1']
    #allocation7 [shape = 'u8[512]{0}', space=vmem, size = 0x400, scoped, tag = 'output window, operand 0, single buffered']
    %7 = vsyncpa [#allocation3], 0
    %8 = vsyncpa [#allocation6], 0
    %9 = vsyncpa [#allocation4], 0
    // Predicated region
    $region2: #{tpu_custom_call.1} parent=1 // pred_check
      _
    $region3: #{tpu_custom_call.1} parent=1 // pred_check_branch
      %11 = sbr.rel (0) target = $region5
    $region4: #{tpu_custom_call.1} parent=1 // pred_region
      %s13 = ssub.s32 64, 64
      %14 = vsyncadd [#allocation3], %s13
      %s16 = sshll.u32 [#allocation2], 4
      %s17 = int_to_ptr.vmem [resolvable:$true] %s16
      %19 = dma.hbm_to_vmem [thread:$0]  %s0, 64, %s17, [#allocation3]
    $region5: #{tpu_custom_call.1} parent=1 // pred_fallthru
      _
    // Predicated region
    $region6: #{tpu_custom_call.1} parent=1 // pred_check
      _
    $region7: #{tpu_custom_call.1} parent=1 // pred_check_branch
      %21 = sbr.rel (0) target = $region9
    $region8: #{tpu_custom_call.1} parent=1 // pred_region
      %s23 = ssub.s32 64, 64
      %24 = vsyncadd [#allocation6], %s23
      %s26 = sshll.u32 [#allocation5], 4
      %s27 = int_to_ptr.vmem [resolvable:$true] %s26
      %29 = dma.hbm_to_vmem [thread:$0]  %s1, 64, %s27, [#allocation6]
    $region9: #{tpu_custom_call.1} parent=1 // pred_fallthru
      _
    // Predicated region
    $region10: #{tpu_custom_call.1} parent=1 // pred_check
      _
    $region11: #{tpu_custom_call.1} parent=1 // pred_check_branch
      %31 = sbr.rel (0) target = $region13
    $region12: #{tpu_custom_call.1} parent=1 // pred_region
      %32 = dma.done [#allocation3], 64
    $region13: #{tpu_custom_call.1} parent=1 // pred_fallthru
      _
    // Predicated region
    $region14: #{tpu_custom_call.1} parent=1 // pred_check
      _
    $region15: #{tpu_custom_call.1} parent=1 // pred_check_branch
      %34 = sbr.rel (0) target = $region17
    $region16: #{tpu_custom_call.1} parent=1 // pred_region
      %35 = dma.done [#allocation6], 64
    $region17: #{tpu_custom_call.1} parent=1 // pred_fallthru
      _
    %v36 = vld [vmem:[#allocation2] sm:$0xf]
    %v37 = vld [vmem:[#allocation5] sm:$0xf]
    %v38 = vmul.f32 %v36, %v37
    %vm39 = vcmask 1043456
    %v40 = vsel %vm39, %v38, 0.0
    %v41 = vrot.slane %v40, 4
    %v42 = vadd.f32 %v40, %v41
    %v43 = vrot.slane %v42, 2
    %v44 = vadd.f32 %v42, %v43
    %v45 = vrot.slane %v44, 1
    %v46 = vadd.f32 %v44, %v45
    %47 = vst [vmem:[#allocation7] sm:$0x1] %v46
    // Predicated region
    $region18: #{tpu_custom_call.1} parent=1 // pred_check
      _
    $region19: #{tpu_custom_call.1} parent=1 // pred_check_branch
      %49 = sbr.rel (0) target = $region21
    $region20: #{tpu_custom_call.1} parent=1 // pred_region
      %s51 = ssub.s32 16, 16
      %52 = vsyncadd [#allocation4], %s51
      %s54 = sshll.u32 [#allocation7], 4
      %s55 = int_to_ptr.vmem [resolvable:$true] %s54
      %57 = dma.vmem_to_hbm [thread:$0]  %s55, 16, %s2, [#allocation4]
    $region21: #{tpu_custom_call.1} parent=1 // pred_fallthru
      _
    // Predicated region
    $region22: #{tpu_custom_call.1} parent=1 // pred_check
      _
    $region23: #{tpu_custom_call.1} parent=1 // pred_check_branch
      %59 = sbr.rel (0) target = $region25
    $region24: #{tpu_custom_call.1} parent=1 // pred_region
      %60 = dma.done [#allocation4], 16
    $region25: #{tpu_custom_call.1} parent=1 // pred_fallthru
      _
    %61 = vsyncpa [#allocation3], 1
    %62 = vsyncpa [#allocation6], 1
    %63 = vsyncpa [#allocation4], 1

</llo_original>
